<compile_context>
chip_gen: v6e
topology: v6e:2x2x1
jax: 0.10.0
libtpu: 0.0.40
codegen_flags: <defaults>
</compile_context>

<pallas_src>
import jax
import jax.numpy as jnp
from jax.experimental import pallas as pl
from jax.experimental.pallas import tpu as pltpu


_SQRT2 = float(2.0 ** 0.5)


def _make_kernel(c_in, c_out, H, W, t_l, with_r, with_boundary):
    """Kernel closure for fixed channel counts / spatial dims / feature flags."""
    w_is_pow2 = W > 0 and (W & (W - 1)) == 0
    shift = W.bit_length() - 1 if w_is_pow2 else 0

    def kernel(*refs):
        if with_boundary:
            x_ref, hm_ref, o_ref = refs
        else:
            x_ref, o_ref = refs
            hm_ref = None

        t_b = x_ref.shape[0]

        # ---- pass-through of the input channels (lane-dense copy) ----
        o_ref[:, 0:c_in, :] = x_ref[...]

        # ---- coordinate channels from a flat spatial iota ----
        base = pl.program_id(1) * t_l
        idx = base + jax.lax.broadcasted_iota(jnp.int32, (1, 1, t_l), 2)
        if w_is_pow2:
            row = (idx >> shift).astype(jnp.float32)      # x_dim index i
            col = (idx & (W - 1)).astype(jnp.float32)     # y_dim index j
        else:
            idx_f = idx.astype(jnp.float32)
            row = jnp.floor((idx_f + 0.5) * (1.0 / W))
            col = idx_f - row * float(W)

        xx = (row / float(H - 1)) * 2.0 - 1.0             # varies along x_dim
        yy = (col / float(W - 1)) * 2.0 - 1.0             # varies along y_dim

        def put(ch, val_111):
            o_ref[:, ch:ch + 1, :] = jnp.broadcast_to(
                val_111, (t_b, 1, t_l)).astype(o_ref.dtype)

        put(c_in, xx)
        put(c_in + 1, yy)

        nxt = c_in + 2
        if with_r:
            # max(sqrt(xx^2+yy^2)) == sqrt(2) analytically (xx, yy hit +/-1 at
            # the corners), so normalize with a constant (no XLU max-reduce).
            rr = jnp.sqrt(xx * xx + yy * yy) * (1.0 / _SQRT2)
            put(nxt, rr)
            nxt += 1

        if with_boundary:
            mask = hm_ref[...] > 0.05                      # (t_b, 1, t_l)
            xx_b = jnp.broadcast_to(xx, (t_b, 1, t_l))
            yy_b = jnp.broadcast_to(yy, (t_b, 1, t_l))
            zero = jnp.zeros_like(xx_b)
            o_ref[:, nxt:nxt + 1, :] = jnp.where(mask, xx_b, zero).astype(o_ref.dtype)
            o_ref[:, nxt + 1:nxt + 2, :] = jnp.where(mask, yy_b, zero).astype(o_ref.dtype)

    return kernel


def _pick_spatial_tile(L, max_elems):
    """Largest lane tile that is a multiple of 128 dividing L and <= max_elems."""
    if L <= max_elems:
        return L
    t = (min(L, max_elems) // 128) * 128
    while t >= 128:
        if L % t == 0:
            return t
        t -= 128
    return L  # fallback: full extent (satisfies the full-dim block rule)


def _largest_divisor_leq(n, cap):
    cap = max(1, min(n, int(cap)))
    for d in range(cap, 0, -1):
        if n % d == 0:
            return d
    return 1


def add_coords(x, heatmap=None, with_r=False, with_boundary=False):
    """Pallas implementation of AddCoordsTh.forward.

    x:       (B, C, x_dim, y_dim)
    heatmap: optional (B, Ch, x_dim, y_dim); its last channel is the boundary map.
    """
    B, C, H, W = x.shape
    use_boundary = with_boundary and (heatmap is not None)
    C_out = C + 2 + (1 if with_r else 0) + (2 if use_boundary else 0)
    L = H * W

    # Lane-dense views: fold the spatial dims into one wide lane axis (free reshape).
    x_flat = x.reshape(B, C, L)
    args = [x_flat]

    Ch = 0
    hm_itemsize = 0
    if use_boundary:
        Ch = heatmap.shape[1]
        args.append(heatmap.reshape(B, Ch, L))
        hm_itemsize = jnp.dtype(heatmap.dtype).itemsize

    # ---- tile sizing from the per-generation VMEM capacity ----
    try:
        vmem_cap = int(pltpu.get_tpu_info().vmem_capacity_bytes)
    except Exception:
        vmem_cap = 64 * 1024 * 1024  # conservative (v7x-sized) fallback
    budget = vmem_cap // 4           # per-step working set; x2 double-buffering

    itemsize = jnp.dtype(x.dtype).itemsize
    bytes_per_elem = (C + C_out) * itemsize + hm_itemsize   # per batch, per spatial elem

    t_l = _pick_spatial_tile(L, max(128, budget // (2 * bytes_per_elem)))
    t_b = _largest_divisor_leq(B, max(1, budget // (2 * bytes_per_elem * t_l)))
    grid = (B // t_b, L // t_l)

    in_specs = [pl.BlockSpec((t_b, C, t_l), lambda bi, li: (bi, 0, li))]
    if use_boundary:
        last_ch = Ch - 1
        in_specs.append(
            pl.BlockSpec((t_b, 1, t_l), lambda bi, li, _c=last_ch: (bi, _c, li)))
    out_spec = pl.BlockSpec((t_b, C_out, t_l), lambda bi, li: (bi, 0, li))

    kernel = _make_kernel(C, C_out, H, W, t_l, with_r, use_boundary)

    cp = {"dimension_semantics": ("parallel", "parallel")}
    needed = 2 * t_b * t_l * bytes_per_elem + (4 << 20)
    if needed > (32 << 20):
        cp["vmem_limit_bytes"] = int(min(needed, vmem_cap))

    out_flat = pl.pallas_call(
        kernel,
        out_shape=jax.ShapeDtypeStruct((B, C_out, L), x.dtype),
        grid_spec=pltpu.PrefetchScalarGridSpec(
            num_scalar_prefetch=0,
            grid=grid,
            in_specs=in_specs,
            out_specs=out_spec,
        ),
        compiler_params=pltpu.CompilerParams(**cp),
    )(*args)
    return out_flat.reshape(B, C_out, H, W)


def _ref_add_coords(x, heatmap=None, with_r=False, with_boundary=False):
    """Pure-JAX reference matching the PyTorch semantics exactly."""
    B, C, H, W = x.shape
    i = jnp.arange(H, dtype=jnp.float32).reshape(1, 1, H, 1)
    j = jnp.arange(W, dtype=jnp.float32).reshape(1, 1, 1, W)
    xx = jnp.broadcast_to(i / (H - 1) * 2.0 - 1.0, (B, 1, H, W)).astype(x.dtype)
    yy = jnp.broadcast_to(j / (W - 1) * 2.0 - 1.0, (B, 1, H, W)).astype(x.dtype)
    parts = [x, xx, yy]
    if with_r:
        rr = jnp.sqrt(xx * xx + yy * yy)
        rr = rr / jnp.max(rr)
        parts.append(rr)
    if with_boundary and heatmap is not None:
        b = jnp.clip(heatmap[:, -1:, :, :], 0.0, 1.0)
        parts.append(jnp.where(b > 0.05, xx, jnp.zeros_like(xx)))
        parts.append(jnp.where(b > 0.05, yy, jnp.zeros_like(yy)))
    return jnp.concatenate(parts, axis=1)


if __name__ == "__main__":
    key = jax.random.PRNGKey(0)
    k1, k2 = jax.random.split(key)

    B, C, H, W = 2, 4, 16, 16  # small instance of the module (x_dim = y_dim = 16)
    x = jax.random.normal(k1, (B, C, H, W), dtype=jnp.float32)
    # heatmap with both sub- and super-threshold values to exercise the mask.
    heatmap = jax.random.uniform(k2, (B, 3, H, W), dtype=jnp.float32) - 0.2

    # Default configuration (with_r=False, with_boundary=False).
    out_basic = add_coords(x)
    jax.block_until_ready(out_basic)
    ref_basic = _ref_add_coords(x)
    assert out_basic.shape == (B, C + 2, H, W)
    assert jnp.allclose(out_basic, ref_basic, atol=1e-5, rtol=1e-5)

    # Full configuration (with_r=True, with_boundary=True, heatmap given).
    out_full = add_coords(x, heatmap, with_r=True, with_boundary=True)
    jax.block_until_ready(out_full)
    ref_full = _ref_add_coords(x, heatmap, with_r=True, with_boundary=True)
    assert out_full.shape == (B, C + 5, H, W)
    assert jnp.allclose(out_full, ref_full, atol=1e-5, rtol=1e-5)

    print("KERNEL_OK")
</pallas_src>

<mosaic_0001>
module attributes {stable_mosaic.version = 11 : i64} {
  func.func @kernel(%arg0: i32, %arg1: i32, %arg2: memref<2x4x256xf32, #tpu.memory_space<vmem>>, %arg3: memref<2x6x256xf32, #tpu.memory_space<vmem>>) attributes {dimension_semantics = [#tpu.dimension_semantics<parallel>, #tpu.dimension_semantics<parallel>], iteration_bounds = array<i64: 1, 1>, scalar_prefetch = 0 : i64, scratch_operands = 0 : i64, tpu.core_type = #tpu.core_type<tc>, window_params = [{transform_indices = @transform_0, window_bounds = array<i64: 2, 4, 256>}, {transform_indices = @transform_1, window_bounds = array<i64: 2, 6, 256>}]} {
    %c0 = arith.constant 0 : index
    %c0_0 = arith.constant 0 : index
    %c0_1 = arith.constant 0 : index
    %0 = vector.load %arg2[%c0, %c0_0, %c0_1] : memref<2x4x256xf32, #tpu.memory_space<vmem>>, vector<2x4x256xf32>
    %c0_2 = arith.constant 0 : index
    %c0_3 = arith.constant 0 : index
    %c0_4 = arith.constant 0 : index
    %1 = vector.load %arg3[%c0_2, %c0_3, %c0_4] : memref<2x6x256xf32, #tpu.memory_space<vmem>>, vector<2x4x256xf32>
    tpu.vector_store %arg3[%c0_2, %c0_3, %c0_4], %0 {strides = array<i32>} : memref<2x6x256xf32, #tpu.memory_space<vmem>>, vector<2x4x256xf32>,
    %c256_i32 = arith.constant 256 : i32
    %2 = arith.muli %arg1, %c256_i32 : i32
    %3 = tpu.iota {dimensions = array<i32: 2>} : vector<1x1x256xi32>
    %4 = vector.broadcast %2 : i32 to vector<1x1x256xi32>
    %5 = arith.addi %4, %3 : vector<1x1x256xi32>
    %c4_i32 = arith.constant 4 : i32
    %6 = vector.broadcast %c4_i32 : i32 to vector<1x1x256xi32>
    %7 = arith.shrsi %5, %6 : vector<1x1x256xi32>
    %8 = arith.sitofp %7 : vector<1x1x256xi32> to vector<1x1x256xf32>
    %c15_i32 = arith.constant 15 : i32
    %9 = vector.broadcast %c15_i32 : i32 to vector<1x1x256xi32>
    %10 = arith.andi %5, %9 : vector<1x1x256xi32>
    %11 = arith.sitofp %10 : vector<1x1x256xi32> to vector<1x1x256xf32>
    %cst = arith.constant 1.500000e+01 : f32
    %12 = vector.broadcast %cst : f32 to vector<1x1x256xf32>
    %13 = arith.divf %8, %12 : vector<1x1x256xf32>
    %cst_5 = arith.constant 2.000000e+00 : f32
    %14 = vector.broadcast %cst_5 : f32 to vector<1x1x256xf32>
    %15 = arith.mulf %13, %14 : vector<1x1x256xf32>
    %cst_6 = arith.constant 1.000000e+00 : f32
    %16 = vector.broadcast %cst_6 : f32 to vector<1x1x256xf32>
    %17 = arith.subf %15, %16 : vector<1x1x256xf32>
    %cst_7 = arith.constant 1.500000e+01 : f32
    %18 = vector.broadcast %cst_7 : f32 to vector<1x1x256xf32>
    %19 = arith.divf %11, %18 : vector<1x1x256xf32>
    %cst_8 = arith.constant 2.000000e+00 : f32
    %20 = vector.broadcast %cst_8 : f32 to vector<1x1x256xf32>
    %21 = arith.mulf %19, %20 : vector<1x1x256xf32>
    %cst_9 = arith.constant 1.000000e+00 : f32
    %22 = vector.broadcast %cst_9 : f32 to vector<1x1x256xf32>
    %23 = arith.subf %21, %22 : vector<1x1x256xf32>
    %24 = vector.shape_cast %17 : vector<1x1x256xf32> to vector<1x1x256xf32>
    %25 = vector.broadcast %24 : vector<1x1x256xf32> to vector<2x1x256xf32>
    %c0_10 = arith.constant 0 : index
    %c4 = arith.constant 4 : index
    %c0_11 = arith.constant 0 : index
    %26 = vector.load %arg3[%c0_10, %c4, %c0_11] : memref<2x6x256xf32, #tpu.memory_space<vmem>>, vector<2x1x256xf32>
    tpu.vector_store %arg3[%c0_10, %c4, %c0_11], %25 {strides = array<i32>} : memref<2x6x256xf32, #tpu.memory_space<vmem>>, vector<2x1x256xf32>,
    %27 = vector.shape_cast %23 : vector<1x1x256xf32> to vector<1x1x256xf32>
    %28 = vector.broadcast %27 : vector<1x1x256xf32> to vector<2x1x256xf32>
    %c0_12 = arith.constant 0 : index
    %c5 = arith.constant 5 : index
    %c0_13 = arith.constant 0 : index
    %29 = vector.load %arg3[%c0_12, %c5, %c0_13] : memref<2x6x256xf32, #tpu.memory_space<vmem>>, vector<2x1x256xf32>
    tpu.vector_store %arg3[%c0_12, %c5, %c0_13], %28 {strides = array<i32>} : memref<2x6x256xf32, #tpu.memory_space<vmem>>, vector<2x1x256xf32>,
    return
  }
  func.func @transform_0(%arg0: i32, %arg1: i32) -> (i32, i32, i32) {
    %c0_i32 = arith.constant 0 : i32
    %c0_i32_0 = arith.constant 0 : i32
    return %arg0, %c0_i32, %arg1 : i32, i32, i32
  }
  func.func @transform_1(%arg0: i32, %arg1: i32) -> (i32, i32, i32) {
    %c0_i32 = arith.constant 0 : i32
    %c0_i32_0 = arith.constant 0 : i32
    return %arg0, %c0_i32, %arg1 : i32, i32, i32
  }
}

</mosaic_0001>

<llo_original>
// kernel: tpu_custom_call.1
$region0: #{tpu_custom_call.1}
  #allocation0 [shape = 'u32[]', space=smem, size = 0x4, offset = 0x4, fixed_abs, tag = 'smem constant byte address 0x4 - core index']
  #allocation1 [shape = 'u32[144,128]{1,0:T(1,128)}', space=vmem, size = 0x12000, scoped, tag = 'internal scratch']
  %s0 = inlined_call_operand.hbm [shape: f32[2,4,256], index: 0, kind: input, shape index: {}]
  %s1 = inlined_call_operand.vmem [shape: f32[2,6,256], index: 1, kind: output, shape index: {}]
  %s2 = sld [smem:[#allocation0]]
  $region18: #{tpu_custom_call.1} parent=0
    _
  %s4 = ssub.s32 1, %s2
  %s5 = scalar_select 0, %s4, %s2
  $region1: #{tpu_custom_call.1} parent=0
    #allocation2 [shape = 'u8[8192]{0}', space=vmem, size = 0x2000, scoped, tag = 'input window, operand 0, single buffered']
    #allocation3 [shape = 's32[1]{0}', space=sflag, size = 0x4, scoped, tag = 'scoped memory for tpu_custom_call.1']
    %6 = vsyncpa [#allocation3], 0
    // Predicated region
    $region2: #{tpu_custom_call.1} parent=1 // pred_check
      _
    $region3: #{tpu_custom_call.1} parent=1 // pred_check_branch
      %8 = sbr.rel (0) target = $region5
    $region4: #{tpu_custom_call.1} parent=1 // pred_region
      %s10 = ssub.s32 256, 256
      %11 = vsyncadd [#allocation3], %s10
      %s12 = sshll.u32 [#allocation2], 4
      %s13 = int_to_ptr.vmem [resolvable:$true] %s12
      %18 = dma.hbm_to_vmem [thread:$0]  %s0, 256, %s13, [#allocation3], 128, 128, 8
    $region5: #{tpu_custom_call.1} parent=1 // pred_fallthru
      _
    // Predicated region
    $region6: #{tpu_custom_call.1} parent=1 // pred_check
      _
    $region7: #{tpu_custom_call.1} parent=1 // pred_check_branch
      %20 = sbr.rel (0) target = $region9
    $region8: #{tpu_custom_call.1} parent=1 // pred_region
      %21 = dma.done [#allocation3], 256
    $region9: #{tpu_custom_call.1} parent=1 // pred_fallthru
      _
    %v22 = vld [vmem:[#allocation2] sm:$0xff]
    %v23 = vld [vmem:[#allocation2 + $0x8] sm:$0xff]
    %v26 = vcombine.high %v22, %v22
    %v27 = vcombine.high %v23, %v23
    %30 = vst [vmem:[%s1] sm:$0xf] %v22
    %31 = vst [vmem:[%s1 + $0x8] sm:$0xf] %v26
    %32 = vst [vmem:[%s1 + $0x10] sm:$0xf] %v23
    %33 = vst [vmem:[%s1 + $0x18] sm:$0xf] %v27
    %s34 = smul.u32 0, 256
    %v35 = vlaneseq
    %v36 = vand.u32 %v35, 127
    %v37 = vadd.s32 %v36, 128
    %v38 = vstv %s34
    %v39 = vadd.s32 %v38, %v36
    %v40 = vadd.s32 %v38, %v37
    %v41 = vshra.s32 %v39, 4
    %v42 = vshra.s32 %v40, 4
    %v43 = vcvt.s32.f32 %v41
    %v44 = vcvt.s32.f32 %v42
    %v45 = vand.u32 %v39, 15
    %v46 = vand.u32 %v40, 15
    %v47 = vcvt.s32.f32 %v45
    %v48 = vcvt.s32.f32 %v46
    %v49 = vrcp.pop 15.0
    %v50 = vmul.f32 %v43, %v49
    %v51 = vmul.f32 %v44, %v49
    %v52 = vmul.f32 %v50, 2.0
    %v53 = vmul.f32 %v51, 2.0
    %v54 = vsub.f32 %v52, 1.0
    %v55 = vsub.f32 %v53, 1.0
    %v56 = vmul.f32 %v47, %v49
    %v57 = vmul.f32 %v48, %v49
    %v58 = vmul.f32 %v56, 2.0
    %v59 = vmul.f32 %v57, 2.0
    %v60 = vsub.f32 %v58, 1.0
    %v61 = vsub.f32 %v59, 1.0
    %v64 = vcombine.low %v54, %v55
    %v66 = vunpack.c.l.s4 1966171168
    %v67 = vunpack.c.0.s8 %v66
    %v68 = vlaneseq
    %v69 = vshrl.u32 %v68, 7
    %v70 = vsub.s32 %v67, %v69
    %v71 = vrot.slane %v64, %v70
    %v73 = vunpack.c.l.s4 1966171168
    %v74 = vunpack.c.0.s8 %v73
    %v75 = vlaneseq
    %v76 = vshrl.u32 %v75, 7
    %v77 = vsub.s32 %v74, %v76
    %v78 = vrot.slane %v71, %v77
    %v80 = vlaneseq
    %vm81 = vcmp.ge.s32.totalorder %v80, 0
    %vm82 = vcmp.lt.s32.totalorder %v80, 256
    %vm83 = vmand %vm81, %vm82
    %s84 = scalar_lea.vmem %s1, 4
    %85 = vst.msk [vmem:[%s84] ss:$8 sm:$0x3] %vm83, %v78
    %86 = vst.msk [vmem:[%s84] ss:$8 sm:$0x0] %vm83, %v78
    %s87 = scalar_lea.vmem %s1, 20
    %88 = vst.msk [vmem:[%s87] ss:$8 sm:$0x3] %vm83, %v78
    %89 = vst.msk [vmem:[%s87] ss:$8 sm:$0x0] %vm83, %v78
    %v92 = vcombine.low %v60, %v61
    %v94 = vunpack.c.l.s4 1966171168
    %v95 = vunpack.c.0.s8 %v94
    %v96 = vlaneseq
    %v97 = vshrl.u32 %v96, 7
    %v98 = vsub.s32 %v95, %v97
    %v99 = vrot.slane %v92, %v98
    %v101 = vunpack.c.l.s4 1966171168
    %v102 = vunpack.c.0.s8 %v101
    %v103 = vlaneseq
    %v104 = vshrl.u32 %v103, 7
    %v105 = vsub.s32 %v102, %v104
    %v106 = vrot.slane %v99, %v105
    %s108 = scalar_lea.vmem %s1, 5
    %109 = vst.msk [vmem:[%s108] ss:$8 sm:$0x3] %vm83, %v106
    %110 = vst.msk [vmem:[%s108] ss:$8 sm:$0x0] %vm83, %v106
    %s111 = scalar_lea.vmem %s1, 21
    %112 = vst.msk [vmem:[%s111] ss:$8 sm:$0x3] %vm83, %v106
    %113 = vst.msk [vmem:[%s111] ss:$8 sm:$0x0] %vm83, %v106
    // Predicated region
    $region10: #{tpu_custom_call.1} parent=1 // pred_check
      _
    $region11: #{tpu_custom_call.1} parent=1 // pred_check_branch
      %115 = sbr.rel (0) target = $region13
    $region12: #{tpu_custom_call.1} parent=1 // pred_region
      _
    $region13: #{tpu_custom_call.1} parent=1 // pred_fallthru
      _
    // Predicated region
    $region14: #{tpu_custom_call.1} parent=1 // pred_check
      _
    $region15: #{tpu_custom_call.1} parent=1 // pred_check_branch
      %117 = sbr.rel (0) target = $region17
    $region16: #{tpu_custom_call.1} parent=1 // pred_region
      _
    $region17: #{tpu_custom_call.1} parent=1 // pred_fallthru
      _
    %118 = vsyncpa [#allocation3], 1

</llo_original>
